<compile_context>
chip_gen: v6e
topology: v6e:2x2x1
jax: 0.10.0
libtpu: 0.0.40
codegen_flags: <defaults>
</compile_context>

<pallas_src>
import functools

import jax
import jax.numpy as jnp
from jax.experimental import pallas as pl
from jax.experimental.pallas import tpu as pltpu


def _cdiv(a: int, b: int) -> int:
    return -(-a // b)


def _round_up(a: int, b: int) -> int:
    return _cdiv(a, b) * b


def _sublane_multiple(dtype) -> int:
    # 8 for 4-byte, 16 for 2-byte, 32 for 1-byte dtypes (min tile second-minor dim).
    return max(8, 32 // jnp.dtype(dtype).itemsize)


# --------------------- main path: n | 128, in-lane mix ----------------------


def _build_lane_coefs(weights_f32, n):
    """coef[d + n - 1, l] = weights[l % n, l % n + d]  (0 where l%n + d is out of range)."""
    lane = jnp.arange(128, dtype=jnp.int32)
    c = lane % n
    rows = []
    for d in range(-(n - 1), n):
        k = c + d
        valid = (k >= 0) & (k < n)
        kk = jnp.clip(k, 0, n - 1)
        rows.append(jnp.where(valid, weights_f32[c, kk], jnp.float32(0.0)))
    return jnp.stack(rows)                                   # (2n-1, 128) f32


def _lane_mix_kernel(coef_ref, x_ref, o_ref, *, n):
    # coef_ref: (2n-1, 128) f32 resident block.
    # x_ref/o_ref: (TR, 128) tile of the flat, channel-interleaved view.
    # out[l] = sum_d coef_d[l] * x[l + d]; rolls never cross a channel group
    # because n divides 128, so wrap-around lanes are masked by zero coefs.
    x = x_ref[...].astype(jnp.float32)
    acc = coef_ref[pl.ds(n - 1, 1), :] * x                   # d = 0 term
    for d in range(1, n):
        # pltpu.roll follows jnp.roll semantics: roll(x, s)[l] = x[(l - s) % 128],
        # so rolling by (128 - d) lets lane l see x[l + d], rolling by d sees x[l - d].
        acc = acc + coef_ref[pl.ds(n - 1 + d, 1), :] * pltpu.roll(x, shift=128 - d, axis=1)
        acc = acc + coef_ref[pl.ds(n - 1 - d, 1), :] * pltpu.roll(x, shift=d, axis=1)
    o_ref[...] = acc.astype(o_ref.dtype)


def _cross_stitch_inlane(x, weights_f32, n, max_rows_per_block):
    orig_shape = x.shape
    dt = x.dtype
    item = jnp.dtype(dt).itemsize
    ln = x.size
    sub = _sublane_multiple(dt)

    ln_pad = _round_up(ln, sub * 128)
    rows = ln_pad // 128

    flat = x.reshape(-1)
    if ln_pad != ln:
        flat = jnp.pad(flat, (0, ln_pad - ln))
    x2 = flat.reshape(rows, 128)

    # Big blocks to amortize per-step overhead, capped so medium inputs still
    # produce >= 4 grid blocks (keeps both v7x TensorCores busy via "parallel").
    tr = min(max_rows_per_block, max(sub, _cdiv(rows, 4)))
    tr = _round_up(tr, sub)
    grid = _cdiv(rows, tr)

    coef = _build_lane_coefs(weights_f32, n)                  # tiny, resident in VMEM

    block_bytes = tr * 128 * item
    vmem_limit = int(max(32 * 1024 * 1024, 4 * block_bytes + (2 << 20)))
    cost = pl.CostEstimate(flops=2 * ln * n, transcendentals=0,
                           bytes_accessed=2 * ln_pad * item + coef.size * 4)

    out2 = pl.pallas_call(
        functools.partial(_lane_mix_kernel, n=n),
        out_shape=jax.ShapeDtypeStruct((rows, 128), dt),
        grid_spec=pltpu.PrefetchScalarGridSpec(
            num_scalar_prefetch=0,
            grid=(grid,),
            in_specs=[
                pl.BlockSpec((2 * n - 1, 128), lambda i: (0, 0)),   # coef table (constant block)
                pl.BlockSpec((tr, 128), lambda i: (i, 0)),          # lane-dense x tile
            ],
            out_specs=pl.BlockSpec((tr, 128), lambda i: (i, 0)),
        ),
        compiler_params=pltpu.CompilerParams(
            dimension_semantics=("parallel",),
            vmem_limit_bytes=vmem_limit,
        ),
        cost_estimate=cost,
    )(coef, x2)

    return out2.reshape(-1)[:ln].reshape(orig_shape)


# ------------- fallback path: n does not divide 128 (channel-major) ---------


def _channel_major_kernel(w_ref, x_ref, o_ref):
    # w_ref: (n, n) f32 in SMEM (original `weights`, not transposed).
    # x_ref / o_ref: (n, TR, 128) channel-major tiles.
    n = o_ref.shape[0]
    xs = [x_ref[k].astype(jnp.float32) for k in range(n)]     # each channel loaded once
    for m in range(n):
        acc = w_ref[m, 0] * xs[0]
        for k in range(1, n):
            acc = acc + w_ref[m, k] * xs[k]
        o_ref[m] = acc.astype(o_ref.dtype)


def _cross_stitch_channel_major(x, weights_f32, n, max_rows_per_block):
    # TODO(synk): this path keeps one (L,n)<->(n,L) transpose each way; it is only
    # used when n does not divide 128, where the in-lane roll formulation is invalid.
    orig_shape = x.shape
    dt = x.dtype
    item = jnp.dtype(dt).itemsize
    L = x.size // n
    sub = _sublane_multiple(dt)

    rows = _round_up(_cdiv(L, 128), sub)
    lp = rows * 128
    xt = x.reshape(L, n).T
    if lp != L:
        xt = jnp.pad(xt, ((0, 0), (0, lp - L)))
    x3 = xt.reshape(n, rows, 128)

    tr = min(max_rows_per_block, max(sub, _cdiv(rows, 4)))
    tr = min(tr, max(sub, (2 * 1024 * 1024) // (n * 128 * item)))   # ~2 MiB blocks
    tr = _round_up(tr, sub)
    grid = _cdiv(rows, tr)

    block_bytes = n * tr * 128 * item
    vmem_limit = int(max(32 * 1024 * 1024, 4 * block_bytes + (2 << 20)))
    cost = pl.CostEstimate(flops=2 * L * n * n, transcendentals=0,
                           bytes_accessed=2 * lp * n * item)

    out3 = pl.pallas_call(
        _channel_major_kernel,
        out_shape=jax.ShapeDtypeStruct((n, rows, 128), dt),
        grid_spec=pltpu.PrefetchScalarGridSpec(
            num_scalar_prefetch=0,
            grid=(grid,),
            in_specs=[
                pl.BlockSpec(memory_space=pltpu.MemorySpace.SMEM),  # n*n weight scalars
                pl.BlockSpec((n, tr, 128), lambda i: (0, i, 0)),
            ],
            out_specs=pl.BlockSpec((n, tr, 128), lambda i: (0, i, 0)),
        ),
        compiler_params=pltpu.CompilerParams(
            dimension_semantics=("parallel",),
            vmem_limit_bytes=vmem_limit,
        ),
        cost_estimate=cost,
    )(weights_f32, x3)

    return out3.reshape(n, lp)[:, :L].T.reshape(orig_shape)


# --------------------------------- public API -------------------------------


def cross_stitch_forward(x, weights, *, max_rows_per_block=4096):
    """x: (..., n), weights: (n, n) -> out[..., m] = sum_k weights[m, k] * x[..., k]."""
    n = x.shape[-1]
    assert weights.shape == (n, n)
    w32 = weights.astype(jnp.float32)           # f32 accumulate, cast on store
    if 128 % n == 0:
        return _cross_stitch_inlane(x, w32, n, max_rows_per_block)
    return _cross_stitch_channel_major(x, w32, n, max_rows_per_block)


def make_cross_stitch_weights(n: int) -> jnp.ndarray:
    """Deterministic init matching the PyTorch module's __init__ (requires n >= 2)."""
    assert n >= 2, "PyTorch init divides by (n - 1)"
    off = 0.1 / (n - 1)
    return jnp.eye(n, dtype=jnp.float32) * (0.9 - off) + off


if __name__ == "__main__":
    key = jax.random.PRNGKey(0)
    fwd = jax.jit(cross_stitch_forward)

    def check(x, weights, tol):
        out = jax.block_until_ready(fwd(x, weights))
        ref = jnp.einsum("...k,mk->...m", x.astype(jnp.float32),
                         weights.astype(jnp.float32),
                         precision=jax.lax.Precision.HIGHEST)
        assert out.shape == x.shape and out.dtype == x.dtype
        assert jnp.allclose(out.astype(jnp.float32), ref, atol=tol, rtol=tol)

    # Primary case, matching the PyTorch module's bmm layout (B, S, n): n=4 sub-networks.
    n = 4
    w = make_cross_stitch_weights(n)
    check(jax.random.normal(key, (2, 8, n), dtype=jnp.float32), w, 1e-5)

    # Unaligned flat length + multiple grid blocks (exercises pad + partial block).
    check(jax.random.normal(jax.random.fold_in(key, 1), (4, 1000, n),
                            dtype=jnp.float32), w, 1e-5)

    # bf16 activations: f32 accumulate, bf16 store (halves HBM bytes).
    check(jax.random.normal(jax.random.fold_in(key, 2), (2, 256, n),
                            dtype=jnp.bfloat16), w, 2e-2)

    # n that does not divide 128 -> channel-major fallback kernel.
    n3 = 3
    check(jax.random.normal(jax.random.fold_in(key, 3), (2, 16, n3),
                            dtype=jnp.float32), make_cross_stitch_weights(n3), 1e-5)

    print("KERNEL_OK")
</pallas_src>

<mosaic_0001>
module attributes {stable_mosaic.version = 11 : i64} {
  func.func @_lane_mix_kernel(%arg0: i32, %arg1: memref<7x128xf32, #tpu.memory_space<vmem>>, %arg2: memref<8x128xf32, #tpu.memory_space<vmem>>, %arg3: memref<8x128xf32, #tpu.memory_space<vmem>>) attributes {dimension_semantics = [#tpu.dimension_semantics<parallel>], iteration_bounds = array<i64: 1>, scalar_prefetch = 0 : i64, scratch_operands = 0 : i64, tpu.core_type = #tpu.core_type<tc>, window_params = [{pipeline_mode = #tpu.pipeline_mode<synchronous>, transform_indices = @transform_0, window_bounds = array<i64: 7, 128>}, {transform_indices = @transform_1, window_bounds = array<i64: 8, 128>}, {transform_indices = @transform_2, window_bounds = array<i64: 8, 128>}]} {
    %c0 = arith.constant 0 : index
    %c0_0 = arith.constant 0 : index
    %0 = vector.load %arg2[%c0, %c0_0] : memref<8x128xf32, #tpu.memory_space<vmem>>, vector<8x128xf32>
    %c3 = arith.constant 3 : index
    %c0_1 = arith.constant 0 : index
    %1 = vector.load %arg1[%c3, %c0_1] : memref<7x128xf32, #tpu.memory_space<vmem>>, vector<1x128xf32>
    %2 = vector.broadcast %1 : vector<1x128xf32> to vector<8x128xf32>
    %3 = arith.mulf %2, %0 : vector<8x128xf32>
    %c4 = arith.constant 4 : index
    %c0_2 = arith.constant 0 : index
    %4 = vector.load %arg1[%c4, %c0_2] : memref<7x128xf32, #tpu.memory_space<vmem>>, vector<1x128xf32>
    %c127_i32 = arith.constant 127 : i32
    %5 = tpu.dynamic_rotate %0 by %c127_i32 dim 1 : vector<8x128xf32>, i32 -> vector<8x128xf32>
    %6 = vector.broadcast %4 : vector<1x128xf32> to vector<8x128xf32>
    %7 = arith.mulf %6, %5 : vector<8x128xf32>
    %8 = arith.addf %3, %7 : vector<8x128xf32>
    %c2 = arith.constant 2 : index
    %c0_3 = arith.constant 0 : index
    %9 = vector.load %arg1[%c2, %c0_3] : memref<7x128xf32, #tpu.memory_space<vmem>>, vector<1x128xf32>
    %c1_i32 = arith.constant 1 : i32
    %10 = tpu.dynamic_rotate %0 by %c1_i32 dim 1 : vector<8x128xf32>, i32 -> vector<8x128xf32>
    %11 = vector.broadcast %9 : vector<1x128xf32> to vector<8x128xf32>
    %12 = arith.mulf %11, %10 : vector<8x128xf32>
    %13 = arith.addf %8, %12 : vector<8x128xf32>
    %c5 = arith.constant 5 : index
    %c0_4 = arith.constant 0 : index
    %14 = vector.load %arg1[%c5, %c0_4] : memref<7x128xf32, #tpu.memory_space<vmem>>, vector<1x128xf32>
    %c126_i32 = arith.constant 126 : i32
    %15 = tpu.dynamic_rotate %0 by %c126_i32 dim 1 : vector<8x128xf32>, i32 -> vector<8x128xf32>
    %16 = vector.broadcast %14 : vector<1x128xf32> to vector<8x128xf32>
    %17 = arith.mulf %16, %15 : vector<8x128xf32>
    %18 = arith.addf %13, %17 : vector<8x128xf32>
    %c1 = arith.constant 1 : index
    %c0_5 = arith.constant 0 : index
    %19 = vector.load %arg1[%c1, %c0_5] : memref<7x128xf32, #tpu.memory_space<vmem>>, vector<1x128xf32>
    %c2_i32 = arith.constant 2 : i32
    %20 = tpu.dynamic_rotate %0 by %c2_i32 dim 1 : vector<8x128xf32>, i32 -> vector<8x128xf32>
    %21 = vector.broadcast %19 : vector<1x128xf32> to vector<8x128xf32>
    %22 = arith.mulf %21, %20 : vector<8x128xf32>
    %23 = arith.addf %18, %22 : vector<8x128xf32>
    %c6 = arith.constant 6 : index
    %c0_6 = arith.constant 0 : index
    %24 = vector.load %arg1[%c6, %c0_6] : memref<7x128xf32, #tpu.memory_space<vmem>>, vector<1x128xf32>
    %c125_i32 = arith.constant 125 : i32
    %25 = tpu.dynamic_rotate %0 by %c125_i32 dim 1 : vector<8x128xf32>, i32 -> vector<8x128xf32>
    %26 = vector.broadcast %24 : vector<1x128xf32> to vector<8x128xf32>
    %27 = arith.mulf %26, %25 : vector<8x128xf32>
    %28 = arith.addf %23, %27 : vector<8x128xf32>
    %c0_7 = arith.constant 0 : index
    %c0_8 = arith.constant 0 : index
    %29 = vector.load %arg1[%c0_7, %c0_8] : memref<7x128xf32, #tpu.memory_space<vmem>>, vector<1x128xf32>
    %c3_i32 = arith.constant 3 : i32
    %30 = tpu.dynamic_rotate %0 by %c3_i32 dim 1 : vector<8x128xf32>, i32 -> vector<8x128xf32>
    %31 = vector.broadcast %29 : vector<1x128xf32> to vector<8x128xf32>
    %32 = arith.mulf %31, %30 : vector<8x128xf32>
    %33 = arith.addf %28, %32 : vector<8x128xf32>
    %c0_9 = arith.constant 0 : index
    %c0_10 = arith.constant 0 : index
    %34 = vector.load %arg3[%c0_9, %c0_10] : memref<8x128xf32, #tpu.memory_space<vmem>>, vector<8x128xf32>
    tpu.vector_store %arg3[%c0_9, %c0_10], %33 {strides = array<i32>} : memref<8x128xf32, #tpu.memory_space<vmem>>, vector<8x128xf32>,
    return
  }
  func.func @transform_0(%arg0: i32) -> (i32, i32) {
    %c0_i32 = arith.constant 0 : i32
    %c0_i32_0 = arith.constant 0 : i32
    %c0_i32_1 = arith.constant 0 : i32
    return %c0_i32, %c0_i32_0 : i32, i32
  }
  func.func @transform_1(%arg0: i32) -> (i32, i32) {
    %c0_i32 = arith.constant 0 : i32
    %c0_i32_0 = arith.constant 0 : i32
    return %arg0, %c0_i32 : i32, i32
  }
  func.func @transform_2(%arg0: i32) -> (i32, i32) {
    %c0_i32 = arith.constant 0 : i32
    %c0_i32_0 = arith.constant 0 : i32
    return %arg0, %c0_i32 : i32, i32
  }
}

</mosaic_0001>

<llo_original>
// kernel: cross_stitch_forward.1
$region0: #{cross_stitch_forward.1}
  #allocation0 [shape = 'u32[]', space=smem, size = 0x4, offset = 0x4, fixed_abs, tag = 'smem constant byte address 0x4 - core index']
  #allocation1 [shape = 'u32[144,128]{1,0:T(1,128)}', space=vmem, size = 0x12000, scoped, tag = 'internal scratch']
  %s0 = inlined_call_operand.vmem [shape: f32[7,128], index: 0, kind: input, shape index: {}]
  %s1 = inlined_call_operand.vmem [shape: f32[8,128], index: 1, kind: input, shape index: {}]
  %s2 = inlined_call_operand.vmem [shape: f32[8,128], index: 2, kind: output, shape index: {}]
  %s3 = sld [smem:[#allocation0]]
  $region18: #{cross_stitch_forward.1} parent=0
    _
  %s5 = ssub.s32 1, %s3
  %s6 = scalar_select 0, %s5, %s3
  // Predicated region
  $region2: #{cross_stitch_forward.1} parent=0 // pred_check
    _
  $region3: #{cross_stitch_forward.1} parent=0 // pred_check_branch
    %8 = sbr.rel (0) target = $region5
  $region4: #{cross_stitch_forward.1} parent=0 // pred_region
    _
  $region5: #{cross_stitch_forward.1} parent=0 // pred_fallthru
    _
  // Predicated region
  $region6: #{cross_stitch_forward.1} parent=0 // pred_check
    _
  $region7: #{cross_stitch_forward.1} parent=0 // pred_check_branch
    %10 = sbr.rel (0) target = $region9
  $region8: #{cross_stitch_forward.1} parent=0 // pred_region
    _
  $region9: #{cross_stitch_forward.1} parent=0 // pred_fallthru
    _
  %v11 = vld [vmem:[%s1] sm:$0xff]
  %v12 = vld [vmem:[%s0 + $0x3] sm:$0x1]
  %v13 = vlaneseq
  %v14 = vshrl.u32 %v13, 7
  %v15 = vsub.s32 0, %v14
  %v16 = vrot.slane %v12, %v15
  %v17 = vmul.f32 %v16, %v11
  %v18 = vld [vmem:[%s0 + $0x4] sm:$0x1]
  %19 = vrot.lane.b32.xlu0 %v11, 127
  %v20 = vpop.permute.xlu0 %19
  %v21 = vlaneseq
  %v22 = vshrl.u32 %v21, 7
  %v23 = vsub.s32 0, %v22
  %v24 = vrot.slane %v18, %v23
  %v25 = vmul.f32 %v24, %v20
  %v26 = vadd.f32 %v17, %v25
  %v27 = vld [vmem:[%s0 + $0x2] sm:$0x1]
  %28 = vrot.lane.b32.xlu0 %v11, 1
  %v29 = vpop.permute.xlu0 %28
  %v30 = vlaneseq
  %v31 = vshrl.u32 %v30, 7
  %v32 = vsub.s32 0, %v31
  %v33 = vrot.slane %v27, %v32
  %v34 = vmul.f32 %v33, %v29
  %v35 = vadd.f32 %v26, %v34
  %v36 = vld [vmem:[%s0 + $0x5] sm:$0x1]
  %37 = vrot.lane.b32.xlu0 %v11, 126
  %v38 = vpop.permute.xlu0 %37
  %v39 = vlaneseq
  %v40 = vshrl.u32 %v39, 7
  %v41 = vsub.s32 0, %v40
  %v42 = vrot.slane %v36, %v41
  %v43 = vmul.f32 %v42, %v38
  %v44 = vadd.f32 %v35, %v43
  %v45 = vld [vmem:[%s0 + $0x1] sm:$0x1]
  %46 = vrot.lane.b32.xlu0 %v11, 2
  %v47 = vpop.permute.xlu0 %46
  %v48 = vlaneseq
  %v49 = vshrl.u32 %v48, 7
  %v50 = vsub.s32 0, %v49
  %v51 = vrot.slane %v45, %v50
  %v52 = vmul.f32 %v51, %v47
  %v53 = vadd.f32 %v44, %v52
  %v54 = vld [vmem:[%s0 + $0x6] sm:$0x1]
  %55 = vrot.lane.b32.xlu0 %v11, 125
  %v56 = vpop.permute.xlu0 %55
  %v57 = vlaneseq
  %v58 = vshrl.u32 %v57, 7
  %v59 = vsub.s32 0, %v58
  %v60 = vrot.slane %v54, %v59
  %v61 = vmul.f32 %v60, %v56
  %v62 = vadd.f32 %v53, %v61
  %v63 = vld [vmem:[%s0] sm:$0x1]
  %64 = vrot.lane.b32.xlu0 %v11, 3
  %v65 = vpop.permute.xlu0 %64
  %v66 = vlaneseq
  %v67 = vshrl.u32 %v66, 7
  %v68 = vsub.s32 0, %v67
  %v69 = vrot.slane %v63, %v68
  %v70 = vmul.f32 %v69, %v65
  %v71 = vadd.f32 %v62, %v70
  %72 = vst [vmem:[%s2] sm:$0xff] %v71
  // Predicated region
  $region10: #{cross_stitch_forward.1} parent=0 // pred_check
    _
  $region11: #{cross_stitch_forward.1} parent=0 // pred_check_branch
    %74 = sbr.rel (0) target = $region13
  $region12: #{cross_stitch_forward.1} parent=0 // pred_region
    _
  $region13: #{cross_stitch_forward.1} parent=0 // pred_fallthru
    _
  // Predicated region
  $region14: #{cross_stitch_forward.1} parent=0 // pred_check
    _
  $region15: #{cross_stitch_forward.1} parent=0 // pred_check_branch
    %76 = sbr.rel (0) target = $region17
  $region16: #{cross_stitch_forward.1} parent=0 // pred_region
    _
  $region17: #{cross_stitch_forward.1} parent=0 // pred_fallthru
    _

</llo_original>
